<compile_context>
chip_gen: v6e
topology: v6e:2x2x1
jax: 0.10.0
libtpu: 0.0.40
codegen_flags: <defaults>
</compile_context>

<pallas_src>
import functools

import jax
import jax.numpy as jnp
from jax.experimental import pallas as pl
from jax.experimental.pallas import tpu as pltpu


def _mmln_kernel(x_ref, p_ref, o_ref, *, eps):
    # x_ref : VMEM (block_t, D)   current (batch, T-tile); batch dim squeezed
    # p_ref : VMEM (2, D) f32     row 0 = w^2, row 1 = c_b (per current batch)
    # o_ref : VMEM (block_t, D)
    x = x_ref[...].astype(jnp.float32)
    d = x.shape[-1]
    inv_d = jnp.float32(1.0 / d)

    # Two-pass (centered) statistics: robust when |mean| >> std.
    mean = jnp.sum(x, axis=-1, keepdims=True) * inv_d          # (block_t, 1)
    xc = x - mean
    var = jnp.sum(xc * xc, axis=-1, keepdims=True) * inv_d     # (block_t, 1)
    xhat = xc * jax.lax.rsqrt(var + eps)                       # (block_t, D)

    # Folded double affine + ConBias:  y = xhat * w^2 + c_b
    w2 = p_ref[0:1, :]                                         # (1, D)
    c = p_ref[1:2, :]                                          # (1, D)
    o_ref[...] = (xhat * w2 + c).astype(o_ref.dtype)


def _vmem_capacity_bytes(default=64 * 1024 * 1024):
    """Best-effort VMEM capacity query; conservative fallback (v7x value)."""
    try:
        info = pltpu.get_tpu_info()
        cap = getattr(info, "vmem_capacity_bytes", None)
        if cap:
            return int(cap)
    except Exception:
        pass
    return default


def _sublane_rows(dtype):
    # Rows per packed sublane tile: 8 for 32-bit, 16 for 16-bit, 32 for 8-bit.
    return {4: 8, 2: 16, 1: 32}.get(jnp.dtype(dtype).itemsize, 8)


def _pick_block_t(t, d, itemsize, budget_bytes, sublane):
    bt = min(t, max(sublane, budget_bytes // max(1, d * itemsize)))
    if bt < t:
        bt = max(sublane, (bt // sublane) * sublane)
    return int(bt)


def mml_norm(x, conv_info, ln_weight, ln_bias, cb_weight, cb_bias, *,
             eps=1e-5, block_t=None, vmem_limit_bytes=None):
    """x: [B, T, D], conv_info: [B, num_con] or None, cb_weight: [num_con, D]."""
    B, T, D = x.shape

    # --- fold all per-channel / per-batch constants in the wrapper (tiny) ---
    w = ln_weight.reshape(1, D).astype(jnp.float32)
    bb = ln_bias.reshape(1, D).astype(jnp.float32)
    w2 = w * w                                                  # (1, D)
    bwb = bb * w + bb                                           # (1, D)
    if conv_info is not None:
        num_con = conv_info.shape[-1]
        tar = jnp.tanh(conv_info.astype(jnp.float32)
                       @ cb_weight.reshape(num_con, D).astype(jnp.float32)
                       + cb_bias.reshape(1, D).astype(jnp.float32))   # (B, D)
        c_b = bwb + tar * w                                     # (B, D)
    else:
        c_b = jnp.broadcast_to(bwb, (B, D))
    # One packed param slab per batch: row 0 = w^2, row 1 = c_b.
    params = jnp.stack([jnp.broadcast_to(w2, (B, D)), c_b], axis=1)  # (B, 2, D)

    # --- dtype- and generation-aware tile sizing ---
    vmem_cap = _vmem_capacity_bytes()
    itemsize = jnp.dtype(x.dtype).itemsize
    sublane = _sublane_rows(x.dtype)
    if block_t is None:
        # ~6-8 MiB tiles: 2 bufs x (in + out) ~= 4x tile stays well under VMEM.
        budget = max(2 << 20, min(8 << 20, vmem_cap // 10))
        block_t = _pick_block_t(T, D, itemsize, budget, sublane)
        # Keep at least 2 grid steps when B == 1 so both v7x TCs get work.
        if B == 1 and block_t >= T and T >= 2 * sublane:
            half = (T + 1) // 2
            block_t = min(T, ((half + sublane - 1) // sublane) * sublane)
    else:
        block_t = min(block_t, T)
        if block_t < T:
            block_t = max(sublane, (block_t // sublane) * sublane)

    if vmem_limit_bytes is None:
        # ~48 MiB on v7x (64 MiB VMEM), 64 MiB on v5e/v6e (128 MiB VMEM).
        vmem_limit_bytes = min(vmem_cap * 3 // 4, 64 << 20)
    # Ensure the double-buffered in+out tiles (plus params) always fit.
    tile_bytes = block_t * D * itemsize
    vmem_limit_bytes = int(min(max(vmem_limit_bytes, 4 * tile_bytes + (2 << 20)),
                               vmem_cap))

    grid = (B, pl.cdiv(T, block_t))
    kernel = functools.partial(_mmln_kernel, eps=eps)

    return pl.pallas_call(
        kernel,
        out_shape=jax.ShapeDtypeStruct((B, T, D), x.dtype),
        grid_spec=pltpu.PrefetchScalarGridSpec(
            num_scalar_prefetch=0,
            grid=grid,
            in_specs=[
                # Leading size-1 batch dim squeezed -> kernel sees (block_t, D).
                pl.BlockSpec((None, block_t, D), lambda b, t: (b, t, 0)),  # x
                pl.BlockSpec((None, 2, D), lambda b, t: (b, 0, 0)),        # [w^2; c_b]
            ],
            out_specs=pl.BlockSpec((None, block_t, D), lambda b, t: (b, t, 0)),
        ),
        compiler_params=pltpu.CompilerParams(
            dimension_semantics=("parallel", "parallel"),
            vmem_limit_bytes=vmem_limit_bytes),
    )(x, params)


def mml_norm_ref(x, conv_info, ln_weight, ln_bias, cb_weight, cb_bias, eps=1e-5):
    """Pure-JAX reference mirroring the PyTorch forward (unfused)."""
    xf = x.astype(jnp.float32)
    mean = jnp.mean(xf, axis=-1, keepdims=True)
    var = jnp.mean((xf - mean) ** 2, axis=-1, keepdims=True)
    xhat = (xf - mean) / jnp.sqrt(var + eps)
    out = xhat * ln_weight + ln_bias
    if conv_info is not None:
        tar = jnp.tanh(conv_info.astype(jnp.float32)
                       @ cb_weight.astype(jnp.float32) + cb_bias)[:, None, :]
        out = out + tar
    return (out * ln_weight + ln_bias).astype(x.dtype)


if __name__ == "__main__":
    # Small but representative: D lane-dense (128), multiple batches.
    B, T, D = 2, 256, 128
    NUM_CON = 4
    EPS = 1e-5

    key = jax.random.PRNGKey(0)
    kx, kc, kw, klw, klb = jax.random.split(key, 5)

    x = jax.random.normal(kx, (B, T, D), dtype=jnp.float32)
    conv_info = jax.random.normal(kc, (B, NUM_CON), dtype=jnp.float32)

    # Non-trivial params to exercise the folded double affine + ConBias.
    ln_weight = 1.0 + 0.1 * jax.random.normal(klw, (D,), dtype=jnp.float32)
    ln_bias = 0.1 * jax.random.normal(klb, (D,), dtype=jnp.float32)
    cb_weight = 0.1 * jax.random.normal(kw, (NUM_CON, D), dtype=jnp.float32)
    cb_bias = 0.05 * jnp.ones((D,), dtype=jnp.float32)

    # TODO(synk): the module also defines an unused AdaptiveAvgPool2d; it is
    # not part of forward(), so intentionally omitted.

    # f32, auto (dtype/generation-aware) tile size.
    y = mml_norm(x, conv_info, ln_weight, ln_bias, cb_weight, cb_bias, eps=EPS)
    y = jax.block_until_ready(y)
    y_ref = mml_norm_ref(x, conv_info, ln_weight, ln_bias, cb_weight, cb_bias,
                         eps=EPS)
    assert y.shape == (B, T, D)
    assert jnp.allclose(y, y_ref, atol=2e-5, rtol=2e-5)

    # bf16 + ragged T: forces a partial final T-tile (block_t=64, T=200) to
    # exercise masked partial-block writeback and bf16 sublane alignment.
    Tr = 200
    xb = jax.random.normal(kx, (B, Tr, D), dtype=jnp.float32).astype(jnp.bfloat16)
    yb = mml_norm(xb, conv_info, ln_weight, ln_bias, cb_weight, cb_bias,
                  eps=EPS, block_t=64)
    yb = jax.block_until_ready(yb)
    yb_ref = mml_norm_ref(xb, conv_info, ln_weight, ln_bias, cb_weight, cb_bias,
                          eps=EPS)
    assert yb.shape == (B, Tr, D)
    assert jnp.allclose(yb.astype(jnp.float32), yb_ref.astype(jnp.float32),
                        atol=2e-2, rtol=2e-2)

    print("KERNEL_OK")
</pallas_src>

<mosaic_0001>
module attributes {stable_mosaic.version = 11 : i64} {
  func.func @_mmln_kernel(%arg0: i32, %arg1: i32, %arg2: memref<1x256x128xf32, #tpu.memory_space<vmem>>, %arg3: memref<1x2x128xf32, #tpu.memory_space<vmem>>, %arg4: memref<1x256x128xf32, #tpu.memory_space<vmem>>) attributes {dimension_semantics = [#tpu.dimension_semantics<parallel>, #tpu.dimension_semantics<parallel>], iteration_bounds = array<i64: 2, 1>, scalar_prefetch = 0 : i64, scratch_operands = 0 : i64, tpu.core_type = #tpu.core_type<tc>, window_params = [{transform_indices = @transform_0, window_bounds = array<i64: 1, 256, 128>}, {transform_indices = @transform_1, window_bounds = array<i64: 1, 2, 128>}, {transform_indices = @transform_2, window_bounds = array<i64: 1, 256, 128>}]} {
    %c0 = arith.constant 0 : index
    %c0_0 = arith.constant 0 : index
    %c0_1 = arith.constant 0 : index
    %0 = vector.load %arg2[%c0, %c0_0, %c0_1] : memref<1x256x128xf32, #tpu.memory_space<vmem>>, vector<1x256x128xf32>
    %1 = vector.shape_cast %0 : vector<1x256x128xf32> to vector<256x128xf32>
    %cst = arith.constant dense<0.000000e+00> : vector<256xf32>
    %2 = vector.multi_reduction <add>, %1, %cst [1] : vector<256x128xf32> to vector<256xf32>
    %3 = vector.shape_cast %2 : vector<256xf32> to vector<256x1xf32>
    %cst_2 = arith.constant 7.812500e-03 : f32
    %4 = vector.broadcast %cst_2 : f32 to vector<256x1xf32>
    %5 = arith.mulf %3, %4 : vector<256x1xf32>
    %6 = vector.broadcast %5 : vector<256x1xf32> to vector<256x128xf32>
    %7 = arith.subf %1, %6 : vector<256x128xf32>
    %8 = arith.mulf %7, %7 : vector<256x128xf32>
    %cst_3 = arith.constant dense<0.000000e+00> : vector<256xf32>
    %9 = vector.multi_reduction <add>, %8, %cst_3 [1] : vector<256x128xf32> to vector<256xf32>
    %10 = vector.shape_cast %9 : vector<256xf32> to vector<256x1xf32>
    %cst_4 = arith.constant 7.812500e-03 : f32
    %11 = vector.broadcast %cst_4 : f32 to vector<256x1xf32>
    %12 = arith.mulf %10, %11 : vector<256x1xf32>
    %cst_5 = arith.constant 9.99999974E-6 : f32
    %13 = vector.broadcast %cst_5 : f32 to vector<256x1xf32>
    %14 = arith.addf %12, %13 : vector<256x1xf32>
    %15 = math.rsqrt %14 : vector<256x1xf32>
    %16 = vector.broadcast %15 : vector<256x1xf32> to vector<256x128xf32>
    %17 = arith.mulf %7, %16 : vector<256x128xf32>
    %c0_6 = arith.constant 0 : index
    %c0_7 = arith.constant 0 : index
    %c0_8 = arith.constant 0 : index
    %18 = vector.load %arg3[%c0_6, %c0_7, %c0_8] : memref<1x2x128xf32, #tpu.memory_space<vmem>>, vector<1x1x128xf32>
    %19 = vector.shape_cast %18 : vector<1x1x128xf32> to vector<1x128xf32>
    %c0_9 = arith.constant 0 : index
    %c1 = arith.constant 1 : index
    %c0_10 = arith.constant 0 : index
    %20 = vector.load %arg3[%c0_9, %c1, %c0_10] : memref<1x2x128xf32, #tpu.memory_space<vmem>>, vector<1x1x128xf32>
    %21 = vector.shape_cast %20 : vector<1x1x128xf32> to vector<1x128xf32>
    %22 = vector.broadcast %19 : vector<1x128xf32> to vector<256x128xf32>
    %23 = arith.mulf %17, %22 : vector<256x128xf32>
    %24 = vector.broadcast %21 : vector<1x128xf32> to vector<256x128xf32>
    %25 = arith.addf %23, %24 : vector<256x128xf32>
    %c0_11 = arith.constant 0 : index
    %c0_12 = arith.constant 0 : index
    %c0_13 = arith.constant 0 : index
    %26 = vector.load %arg4[%c0_11, %c0_12, %c0_13] : memref<1x256x128xf32, #tpu.memory_space<vmem>>, vector<1x256x128xf32>
    %27 = vector.shape_cast %26 : vector<1x256x128xf32> to vector<256x128xf32>
    %28 = vector.shape_cast %25 : vector<256x128xf32> to vector<1x256x128xf32>
    tpu.vector_store %arg4[%c0_11, %c0_12, %c0_13], %28 {strides = array<i32>} : memref<1x256x128xf32, #tpu.memory_space<vmem>>, vector<1x256x128xf32>,
    return
  }
  func.func @transform_0(%arg0: i32, %arg1: i32) -> (i32, i32, i32) {
    %c0_i32 = arith.constant 0 : i32
    %c0_i32_0 = arith.constant 0 : i32
    return %arg0, %arg1, %c0_i32 : i32, i32, i32
  }
  func.func @transform_1(%arg0: i32, %arg1: i32) -> (i32, i32, i32) {
    %c0_i32 = arith.constant 0 : i32
    %c0_i32_0 = arith.constant 0 : i32
    %c0_i32_1 = arith.constant 0 : i32
    return %arg0, %c0_i32, %c0_i32_0 : i32, i32, i32
  }
  func.func @transform_2(%arg0: i32, %arg1: i32) -> (i32, i32, i32) {
    %c0_i32 = arith.constant 0 : i32
    %c0_i32_0 = arith.constant 0 : i32
    return %arg0, %arg1, %c0_i32 : i32, i32, i32
  }
}

</mosaic_0001>

<llo_original>
// kernel: tpu_custom_call.1
$region0: #{tpu_custom_call.1}
  #allocation0 [shape = 'u32[]', space=smem, size = 0x4, offset = 0x4, fixed_abs, tag = 'smem constant byte address 0x4 - core index']
  #allocation1 [shape = 'u32[144,128]{1,0:T(1,128)}', space=vmem, size = 0x12000, scoped, tag = 'internal scratch']
  %s0 = inlined_call_operand.hbm [shape: f32[2,256,128], index: 0, kind: input, shape index: {}]
  %s1 = inlined_call_operand.hbm [shape: f32[2,2,128], index: 1, kind: input, shape index: {}]
  %s2 = inlined_call_operand.hbm [shape: f32[2,256,128], index: 2, kind: output, shape index: {}]
  %s3 = sld [smem:[#allocation0]]
  $region49: #{tpu_custom_call.1} parent=0
    _
  %s5 = ssub.s32 1, %s3
  %s6 = scalar_select 0, %s5, %s3
  $region1: #{tpu_custom_call.1} parent=0
    #allocation2 [shape = 'u8[262144]{0}', space=vmem, size = 0x40000, scoped, tag = 'input window, operand 0']
    #allocation3 [shape = 's32[2]{0}', space=sflag, size = 0x8, scoped, tag = 'scoped memory for tpu_custom_call.1']
    #allocation4 [shape = 's32[2]{0}', space=sflag, size = 0x8, scoped, tag = 'scoped memory for tpu_custom_call.1']
    #allocation5 [shape = 'u8[2048]{0}', space=vmem, size = 0x800, scoped, tag = 'input window, operand 1']
    #allocation6 [shape = 's32[2]{0}', space=sflag, size = 0x8, scoped, tag = 'scoped memory for tpu_custom_call.1']
    #allocation7 [shape = 'u8[262144]{0}', space=vmem, size = 0x40000, scoped, tag = 'output window, operand 0']
    %7 = vsyncpa [#allocation3], 0
    %s8 = scalar_lea.sflag [#allocation3], 1
    %9 = vsyncpa %s8, 0
    %10 = vsyncpa [#allocation6], 0
    %s11 = scalar_lea.sflag [#allocation6], 1
    %12 = vsyncpa %s11, 0
    %13 = vsyncpa [#allocation4], 0
    %s14 = scalar_lea.sflag [#allocation4], 1
    %15 = vsyncpa %s14, 0
    loop: start=0, step=1, limit=4
    $region2: #{tpu_custom_call.1} parent=1 // loop_pre_header
      _
    $region3: #{tpu_custom_call.1} parent=1 // loop_header
      %s17 = sphi 0, %s21
      %p18 = scmp.ge.s32.totalorder %s17, 4
      %s24 = sphi 0, %s36
      %s25 = sphi 0, %s32
      %s26 = sphi 0, %s24
      %s27 = sphi 0, %s25
      %s28 = sphi 0, %s26
      %s29 = sphi 0, %s27
      %s41 = sphi 0, %s43
      %s44 = sphi 0, %s41
      %s45 = sphi 0, %s44
      %s61 = sphi 0, %s45
      %s67 = sphi 0, %s69
      %s70 = sphi 0, %s67
      %s71 = sphi 0, %s70
      %s87 = sphi 0, %s71
      %s95 = sphi 0, %s97
      %s98 = sphi 0, %s95
      %s99 = sphi 0, %s98
      %s115 = sphi 0, %s99
    $region4: #{tpu_custom_call.1} parent=1 // loop_header_branch
      %20 = sbr.rel (%p18) target = $region8
    $region5: #{tpu_custom_call.1} parent=1 // loop_body
      %s22 = ssub.s32 %s17, 1
      %s23 = ssub.s32 %s17, 2
      %s30 = sadd.s32 1, %s25
      %p31 = scmp.ge.s32.totalorder %s30, 1
      %s32 = scalar_select %p31, 0, %s30
      %s33 = sadd.s32 1, %s24
      %s34 = scalar_select %p31, %s33, %s24
      %p35 = scmp.ge.s32.totalorder %s34, 2
      %s36 = scalar_select %p35, 0, %s34
      %s37 = ssub.s32 %s24, %s36
      %s38 = ssub.s32 %s25, %s32
      %s39 = sor.u32 %s37, %s38
      %p40 = scmp.eq.s32.totalorder %s39, 0
      %s42 = sadd.s32 %s41, 1
      %s43 = scalar_select %p40, %s41, %s42
      %p46 = pneg %p40
      %p47 = scmp.eq.s32.totalorder %s17, 1
      %p48 = por %p46, %p47
      %p49 = scmp.ne.s32.totalorder %s41, %s44
      %p50 = scmp.eq.s32.totalorder %s17, 0
      %p51 = por %p49, %p50
      %p52 = scmp.ne.s32.totalorder %s41, %s44
      %p53 = scmp.eq.s32.totalorder %s22, 1
      %p54 = por %p52, %p53
      %p55 = scmp.ne.s32.totalorder %s44, %s45
      %p56 = scmp.eq.s32.totalorder %s22, 0
      %p57 = por %p55, %p56
      %p58 = scmp.ne.s32.totalorder %s44, %s45
      %p59 = scmp.eq.s32.totalorder %s23, 1
      %p60 = por %p58, %p59
      %p62 = scmp.ne.s32.totalorder %s45, %s61
      %p63 = scmp.eq.s32.totalorder %s23, 0
      %p64 = por %p62, %p63
      %s65 = ssub.s32 %s24, %s36
      %p66 = scmp.eq.s32.totalorder %s65, 0
      %s68 = sadd.s32 %s67, 1
      %s69 = scalar_select %p66, %s67, %s68
      %p72 = pneg %p66
      %p73 = scmp.eq.s32.totalorder %s17, 1
      %p74 = por %p72, %p73
      %p75 = scmp.ne.s32.totalorder %s67, %s70
      %p76 = scmp.eq.s32.totalorder %s17, 0
      %p77 = por %p75, %p76
      %p78 = scmp.ne.s32.totalorder %s67, %s70
      %p79 = scmp.eq.s32.totalorder %s22, 1
      %p80 = por %p78, %p79
      %p81 = scmp.ne.s32.totalorder %s70, %s71
      %p82 = scmp.eq.s32.totalorder %s22, 0
      %p83 = por %p81, %p82
      %p84 = scmp.ne.s32.totalorder %s70, %s71
      %p85 = scmp.eq.s32.totalorder %s23, 1
      %p86 = por %p84, %p85
      %p88 = scmp.ne.s32.totalorder %s71, %s87
      %p89 = scmp.eq.s32.totalorder %s23, 0
      %p90 = por %p88, %p89
      %s91 = ssub.s32 %s24, %s36
      %s92 = ssub.s32 %s25, %s32
      %s93 = sor.u32 %s91, %s92
      %p94 = scmp.eq.s32.totalorder %s93, 0
      %s96 = sadd.s32 %s95, 1
      %s97 = scalar_select %p94, %s95, %s96
      %p100 = pneg %p94
      %p101 = scmp.eq.s32.totalorder %s17, 1
      %p102 = por %p100, %p101
      %p103 = scmp.ne.s32.totalorder %s95, %s98
      %p104 = scmp.eq.s32.totalorder %s17, 0
      %p105 = por %p103, %p104
      %p106 = scmp.ne.s32.totalorder %s95, %s98
      %p107 = scmp.eq.s32.totalorder %s22, 1
      %p108 = por %p106, %p107
      %p109 = scmp.ne.s32.totalorder %s98, %s99
      %p110 = scmp.eq.s32.totalorder %s22, 0
      %p111 = por %p109, %p110
      %p112 = scmp.ne.s32.totalorder %s98, %s99
      %p113 = scmp.eq.s32.totalorder %s23, 1
      %p114 = por %p112, %p113
      %p116 = scmp.ne.s32.totalorder %s99, %s115
      %p117 = scmp.eq.s32.totalorder %s23, 0
      %p118 = por %p116, %p117
      %p119 = scmp.le.s32.totalorder 1, %s17
      %p120 = scmp.lt.s32.totalorder %s17, 3
      %p121 = pnand %p119, %p120
      %p122 = pneg %p121
      // Predicated region
      $region9: #{tpu_custom_call.1} parent=5 // pred_check
        _
      $region10: #{tpu_custom_call.1} parent=5 // pred_check_branch
        %124 = sbr.rel (%p121) target = $region12
      $region11: #{tpu_custom_call.1} parent=5 // pred_region
        %s125 = ssub.s32 %s17, 1
      $region12: #{tpu_custom_call.1} parent=5 // pred_fallthru
        _
      %p126 = scmp.lt.s32.totalorder %s17, 2
      // Predicated region
      $region13: #{tpu_custom_call.1} parent=5 // pred_check
        %p127 = pneg %p126
      $region14: #{tpu_custom_call.1} parent=5 // pred_check_branch
        %129 = sbr.rel (%p127) target = $region16
      $region15: #{tpu_custom_call.1} parent=5 // pred_region
        // Predicated region
        $region17: #{tpu_custom_call.1} parent=15 // pred_check
          %p130 = pneg %p51
        $region18: #{tpu_custom_call.1} parent=15 // pred_check_branch
          %132 = sbr.rel (%p130) target = $region20
        $region19: #{tpu_custom_call.1} parent=15 // pred_region
          %s133 = sand.u32 %s41, 1
          %s134 = scalar_lea.sflag [#allocation3], %s133
          %s135 = sand.u32 %s41, 1
          %s136 = smul.addr %s135, 256
          %s137 = scalar_lea.vmem [#allocation2], %s136
          %s138 = smul.u32 32, %s25
          %s140 = ssub.s32 4096, 4096
          %141 = vsyncadd %s134, %s140
          %s142 = smul.addr %s24, 32
          %s143 = sadd.s32 %s138, %s142
          %s144 = smul.addr %s143, 128
          %s145 = scalar_lea.hbm %s0, %s144
          %s146 = sshll.u32 %s137, 4
          %s147 = int_to_ptr.vmem [resolvable:$true] %s146
          %152 = dma.hbm_to_vmem [thread:$0]  %s145, 4096, %s147, %s134, 128, 128, 8
        $region20: #{tpu_custom_call.1} parent=15 // pred_fallthru
          _
        // Predicated region
        $region21: #{tpu_custom_call.1} parent=15 // pred_check
          %p153 = pneg %p77
        $region22: #{tpu_custom_call.1} parent=15 // pred_check_branch
          %155 = sbr.rel (%p153) target = $region24
        $region23: #{tpu_custom_call.1} parent=15 // pred_region
          %s156 = sand.u32 %s67, 1
          %s157 = scalar_lea.sflag [#allocation6], %s156
          %s158 = sand.u32 %s67, 1
          %s159 = smul.addr %s158, 2
          %s160 = scalar_lea.vmem [#allocation5], %s159
          %s162 = ssub.s32 32, 32
          %163 = vsyncadd %s157, %s162
          %s164 = smul.addr %s24, 32
          %s165 = scalar_lea.hbm %s1, %s164
          %s167 = sshll.u32 %s160, 4
          %s168 = int_to_ptr.vmem [resolvable:$true] %s167
          %170 = dma.hbm_to_vmem [thread:$0]  %s165, 32, %s168, %s157
        $region24: #{tpu_custom_call.1} parent=15 // pred_fallthru
          _
      $region16: #{tpu_custom_call.1} parent=5 // pred_fallthru
        _
      %p171 = scmp.le.s32.totalorder 1, %s17
      %p172 = scmp.lt.s32.totalorder %s17, 3
      %p173 = pnand %p171, %p172
      %p174 = pneg %p173
      // Predicated region
      $region25: #{tpu_custom_call.1} parent=5 // pred_check
        _
      $region26: #{tpu_custom_call.1} parent=5 // pred_check_branch
        %176 = sbr.rel (%p173) target = $region28
      $region27: #{tpu_custom_call.1} parent=5 // pred_region
        %s177 = ssub.s32 %s17, 1
        %s178 = sand.u32 %s44, 1
        %s179 = scalar_lea.sflag [#allocation3], %s178
        %s180 = sand.u32 %s44, 1
        %s181 = smul.addr %s180, 256
        %s182 = scalar_lea.vmem [#allocation2], %s181
        // Predicated region
        $region29: #{tpu_custom_call.1} parent=27 // pred_check
          %p183 = pneg %p57
        $region30: #{tpu_custom_call.1} parent=27 // pred_check_branch
          %185 = sbr.rel (%p183) target = $region32
        $region31: #{tpu_custom_call.1} parent=27 // pred_region
          %186 = dma.done %s179, 4096
        $region32: #{tpu_custom_call.1} parent=27 // pred_fallthru
          _
        %s187 = sand.u32 %s70, 1
        %s188 = scalar_lea.sflag [#allocation6], %s187
        %s189 = sand.u32 %s70, 1
        %s190 = smul.addr %s189, 2
        %s191 = scalar_lea.vmem [#allocation5], %s190
        // Predicated region
        $region33: #{tpu_custom_call.1} parent=27 // pred_check
          %p192 = pneg %p83
        $region34: #{tpu_custom_call.1} parent=27 // pred_check_branch
          %194 = sbr.rel (%p192) target = $region36
        $region35: #{tpu_custom_call.1} parent=27 // pred_region
          %195 = dma.done %s188, 32
        $region36: #{tpu_custom_call.1} parent=27 // pred_fallthru
          _
        %s196 = sand.u32 %s44, 1
        %s197 = scalar_lea.sflag [#allocation3], %s196
        %s198 = sand.u32 %s44, 1
        %s199 = smul.addr %s198, 256
        %s200 = scalar_lea.vmem [#allocation2], %s199
        %p201 = pneg %p57
        %p202 = pneg %p54
        %s203 = sand.u32 %s70, 1
        %s204 = scalar_lea.sflag [#allocation6], %s203
        %s205 = sand.u32 %s70, 1
        %s206 = smul.addr %s205, 2
        %s207 = scalar_lea.vmem [#allocation5], %s206
        %p208 = pneg %p83
        %p209 = pneg %p80
        %p210 = pneg %p111
        %p211 = pneg %p108
        %s212 = sand.u32 %s98, 1
        %s213 = scalar_lea.sflag [#allocation4], %s212
        %s214 = sand.u32 %s98, 1
        %s215 = smul.addr %s214, 256
        %s216 = scalar_lea.vmem [#allocation7], %s215
        %s217 = smul.u32 32, %s27
        %s218 = smul.u32 32, %s27
        %v219 = vld [vmem:[%s182] sm:$0xff]
        %v220 = vld [vmem:[%s182 + $0x8] sm:$0xff]
        %v221 = vld [vmem:[%s182 + $0x10] sm:$0xff]
        %v222 = vld [vmem:[%s182 + $0x18] sm:$0xff]
        %v223 = vld [vmem:[%s182 + $0x20] sm:$0xff]
        %v224 = vld [vmem:[%s182 + $0x28] sm:$0xff]
        %v225 = vld [vmem:[%s182 + $0x30] sm:$0xff]
        %v226 = vld [vmem:[%s182 + $0x38] sm:$0xff]
        %v227 = vld [vmem:[%s182 + $0x40] sm:$0xff]
        %v228 = vld [vmem:[%s182 + $0x48] sm:$0xff]
        %v229 = vld [vmem:[%s182 + $0x50] sm:$0xff]
        %v230 = vld [vmem:[%s182 + $0x58] sm:$0xff]
        %v231 = vld [vmem:[%s182 + $0x60] sm:$0xff]
        %v232 = vld [vmem:[%s182 + $0x68] sm:$0xff]
        %v233 = vld [vmem:[%s182 + $0x70] sm:$0xff]
        %v234 = vld [vmem:[%s182 + $0x78] sm:$0xff]
        %v235 = vld [vmem:[%s182 + $0x80] sm:$0xff]
        %v236 = vld [vmem:[%s182 + $0x88] sm:$0xff]
        %v237 = vld [vmem:[%s182 + $0x90] sm:$0xff]
        %v238 = vld [vmem:[%s182 + $0x98] sm:$0xff]
        %v239 = vld [vmem:[%s182 + $0xa0] sm:$0xff]
        %v240 = vld [vmem:[%s182 + $0xa8] sm:$0xff]
        %v241 = vld [vmem:[%s182 + $0xb0] sm:$0xff]
        %v242 = vld [vmem:[%s182 + $0xb8] sm:$0xff]
        %v243 = vld [vmem:[%s182 + $0xc0] sm:$0xff]
        %v244 = vld [vmem:[%s182 + $0xc8] sm:$0xff]
        %v245 = vld [vmem:[%s182 + $0xd0] sm:$0xff]
        %v246 = vld [vmem:[%s182 + $0xd8] sm:$0xff]
        %v247 = vld [vmem:[%s182 + $0xe0] sm:$0xff]
        %v248 = vld [vmem:[%s182 + $0xe8] sm:$0xff]
        %v249 = vld [vmem:[%s182 + $0xf0] sm:$0xff]
        %v250 = vld [vmem:[%s182 + $0xf8] sm:$0xff]
        %251 = vadd.xlane.f32.xlu0 %v219
        %v252 = vpop.xlane.xlu0 %251
        %253 = vadd.xlane.f32.xlu0 %v220
        %v254 = vpop.xlane.xlu0 %253
        %255 = vadd.xlane.f32.xlu0 %v221
        %v256 = vpop.xlane.xlu0 %255
        %257 = vadd.xlane.f32.xlu0 %v222
        %v258 = vpop.xlane.xlu0 %257
        %259 = vadd.xlane.f32.xlu0 %v223
        %v260 = vpop.xlane.xlu0 %259
        %261 = vadd.xlane.f32.xlu0 %v224
        %v262 = vpop.xlane.xlu0 %261
        %263 = vadd.xlane.f32.xlu0 %v225
        %v264 = vpop.xlane.xlu0 %263
        %265 = vadd.xlane.f32.xlu0 %v226
        %v266 = vpop.xlane.xlu0 %265
        %267 = vadd.xlane.f32.xlu0 %v227
        %v268 = vpop.xlane.xlu0 %267
        %269 = vadd.xlane.f32.xlu0 %v228
        %v270 = vpop.xlane.xlu0 %269
        %271 = vadd.xlane.f32.xlu0 %v229
        %v272 = vpop.xlane.xlu0 %271
        %273 = vadd.xlane.f32.xlu0 %v230
        %v274 = vpop.xlane.xlu0 %273
        %275 = vadd.xlane.f32.xlu0 %v231
        %v276 = vpop.xlane.xlu0 %275
        %277 = vadd.xlane.f32.xlu0 %v232
        %v278 = vpop.xlane.xlu0 %277
        %279 = vadd.xlane.f32.xlu0 %v233
        %v280 = vpop.xlane.xlu0 %279
        %281 = vadd.xlane.f32.xlu0 %v234
        %v282 = vpop.xlane.xlu0 %281
        %283 = vadd.xlane.f32.xlu0 %v235
        %v284 = vpop.xlane.xlu0 %283
        %285 = vadd.xlane.f32.xlu0 %v236
        %v286 = vpop.xlane.xlu0 %285
        %287 = vadd.xlane.f32.xlu0 %v237
        %v288 = vpop.xlane.xlu0 %287
        %289 = vadd.xlane.f32.xlu0 %v238
        %v290 = vpop.xlane.xlu0 %289
        %291 = vadd.xlane.f32.xlu0 %v239
        %v292 = vpop.xlane.xlu0 %291
        %293 = vadd.xlane.f32.xlu0 %v240
        %v294 = vpop.xlane.xlu0 %293
        %295 = vadd.xlane.f32.xlu0 %v241
        %v296 = vpop.xlane.xlu0 %295
        %297 = vadd.xlane.f32.xlu0 %v242
        %v298 = vpop.xlane.xlu0 %297
        %299 = vadd.xlane.f32.xlu0 %v243
        %v300 = vpop.xlane.xlu0 %299
        %301 = vadd.xlane.f32.xlu0 %v244
        %v302 = vpop.xlane.xlu0 %301
        %303 = vadd.xlane.f32.xlu0 %v245
        %v304 = vpop.xlane.xlu0 %303
        %305 = vadd.xlane.f32.xlu0 %v246
        %v306 = vpop.xlane.xlu0 %305
        %307 = vadd.xlane.f32.xlu0 %v247
        %v308 = vpop.xlane.xlu0 %307
        %309 = vadd.xlane.f32.xlu0 %v248
        %v310 = vpop.xlane.xlu0 %309
        %311 = vadd.xlane.f32.xlu0 %v249
        %v312 = vpop.xlane.xlu0 %311
        %313 = vadd.xlane.f32.xlu0 %v250
        %v314 = vpop.xlane.xlu0 %313
        %v315 = vmul.f32 %v252, 0.0078125
        %v316 = vmul.f32 %v254, 0.0078125
        %v317 = vmul.f32 %v256, 0.0078125
        %v318 = vmul.f32 %v258, 0.0078125
        %v319 = vmul.f32 %v260, 0.0078125
        %v320 = vmul.f32 %v262, 0.0078125
        %v321 = vmul.f32 %v264, 0.0078125
        %v322 = vmul.f32 %v266, 0.0078125
        %v323 = vmul.f32 %v268, 0.0078125
        %v324 = vmul.f32 %v270, 0.0078125
        %v325 = vmul.f32 %v272, 0.0078125
        %v326 = vmul.f32 %v274, 0.0078125
        %v327 = vmul.f32 %v276, 0.0078125
        %v328 = vmul.f32 %v278, 0.0078125
        %v329 = vmul.f32 %v280, 0.0078125
        %v330 = vmul.f32 %v282, 0.0078125
        %v331 = vmul.f32 %v284, 0.0078125
        %v332 = vmul.f32 %v286, 0.0078125
        %v333 = vmul.f32 %v288, 0.0078125
        %v334 = vmul.f32 %v290, 0.0078125
        %v335 = vmul.f32 %v292, 0.0078125
        %v336 = vmul.f32 %v294, 0.0078125
        %v337 = vmul.f32 %v296, 0.0078125
        %v338 = vmul.f32 %v298, 0.0078125
        %v339 = vmul.f32 %v300, 0.0078125
        %v340 = vmul.f32 %v302, 0.0078125
        %v341 = vmul.f32 %v304, 0.0078125
        %v342 = vmul.f32 %v306, 0.0078125
        %v343 = vmul.f32 %v308, 0.0078125
        %v344 = vmul.f32 %v310, 0.0078125
        %v345 = vmul.f32 %v312, 0.0078125
        %v346 = vmul.f32 %v314, 0.0078125
        %v347 = vsub.f32 %v219, %v315
        %v348 = vsub.f32 %v220, %v316
        %v349 = vsub.f32 %v221, %v317
        %v350 = vsub.f32 %v222, %v318
        %v351 = vsub.f32 %v223, %v319
        %v352 = vsub.f32 %v224, %v320
        %v353 = vsub.f32 %v225, %v321
        %v354 = vsub.f32 %v226, %v322
        %v355 = vsub.f32 %v227, %v323
        %v356 = vsub.f32 %v228, %v324
        %v357 = vsub.f32 %v229, %v325
        %v358 = vsub.f32 %v230, %v326
        %v359 = vsub.f32 %v231, %v327
        %v360 = vsub.f32 %v232, %v328
        %v361 = vsub.f32 %v233, %v329
        %v362 = vsub.f32 %v234, %v330
        %v363 = vsub.f32 %v235, %v331
        %v364 = vsub.f32 %v236, %v332
        %v365 = vsub.f32 %v237, %v333
        %v366 = vsub.f32 %v238, %v334
        %v367 = vsub.f32 %v239, %v335
        %v368 = vsub.f32 %v240, %v336
        %v369 = vsub.f32 %v241, %v337
        %v370 = vsub.f32 %v242, %v338
        %v371 = vsub.f32 %v243, %v339
        %v372 = vsub.f32 %v244, %v340
        %v373 = vsub.f32 %v245, %v341
        %v374 = vsub.f32 %v246, %v342
        %v375 = vsub.f32 %v247, %v343
        %v376 = vsub.f32 %v248, %v344
        %v377 = vsub.f32 %v249, %v345
        %v378 = vsub.f32 %v250, %v346
        %v379 = vmul.f32 %v347, %v347
        %v380 = vmul.f32 %v348, %v348
        %v381 = vmul.f32 %v349, %v349
        %v382 = vmul.f32 %v350, %v350
        %v383 = vmul.f32 %v351, %v351
        %v384 = vmul.f32 %v352, %v352
        %v385 = vmul.f32 %v353, %v353
        %v386 = vmul.f32 %v354, %v354
        %v387 = vmul.f32 %v355, %v355
        %v388 = vmul.f32 %v356, %v356
        %v389 = vmul.f32 %v357, %v357
        %v390 = vmul.f32 %v358, %v358
        %v391 = vmul.f32 %v359, %v359
        %v392 = vmul.f32 %v360, %v360
        %v393 = vmul.f32 %v361, %v361
        %v394 = vmul.f32 %v362, %v362
        %v395 = vmul.f32 %v363, %v363
        %v396 = vmul.f32 %v364, %v364
        %v397 = vmul.f32 %v365, %v365
        %v398 = vmul.f32 %v366, %v366
        %v399 = vmul.f32 %v367, %v367
        %v400 = vmul.f32 %v368, %v368
        %v401 = vmul.f32 %v369, %v369
        %v402 = vmul.f32 %v370, %v370
        %v403 = vmul.f32 %v371, %v371
        %v404 = vmul.f32 %v372, %v372
        %v405 = vmul.f32 %v373, %v373
        %v406 = vmul.f32 %v374, %v374
        %v407 = vmul.f32 %v375, %v375
        %v408 = vmul.f32 %v376, %v376
        %v409 = vmul.f32 %v377, %v377
        %v410 = vmul.f32 %v378, %v378
        %411 = vadd.xlane.f32.xlu0 %v379
        %v412 = vpop.xlane.xlu0 %411
        %413 = vadd.xlane.f32.xlu0 %v380
        %v414 = vpop.xlane.xlu0 %413
        %415 = vadd.xlane.f32.xlu0 %v381
        %v416 = vpop.xlane.xlu0 %415
        %417 = vadd.xlane.f32.xlu0 %v382
        %v418 = vpop.xlane.xlu0 %417
        %419 = vadd.xlane.f32.xlu0 %v383
        %v420 = vpop.xlane.xlu0 %419
        %421 = vadd.xlane.f32.xlu0 %v384
        %v422 = vpop.xlane.xlu0 %421
        %423 = vadd.xlane.f32.xlu0 %v385
        %v424 = vpop.xlane.xlu0 %423
        %425 = vadd.xlane.f32.xlu0 %v386
        %v426 = vpop.xlane.xlu0 %425
        %427 = vadd.xlane.f32.xlu0 %v387
        %v428 = vpop.xlane.xlu0 %427
        %429 = vadd.xlane.f32.xlu0 %v388
        %v430 = vpop.xlane.xlu0 %429
        %431 = vadd.xlane.f32.xlu0 %v389
        %v432 = vpop.xlane.xlu0 %431
        %433 = vadd.xlane.f32.xlu0 %v390
        %v434 = vpop.xlane.xlu0 %433
        %435 = vadd.xlane.f32.xlu0 %v391
        %v436 = vpop.xlane.xlu0 %435
        %437 = vadd.xlane.f32.xlu0 %v392
        %v438 = vpop.xlane.xlu0 %437
        %439 = vadd.xlane.f32.xlu0 %v393
        %v440 = vpop.xlane.xlu0 %439
        %441 = vadd.xlane.f32.xlu0 %v394
        %v442 = vpop.xlane.xlu0 %441
        %443 = vadd.xlane.f32.xlu0 %v395
        %v444 = vpop.xlane.xlu0 %443
        %445 = vadd.xlane.f32.xlu0 %v396
        %v446 = vpop.xlane.xlu0 %445
        %447 = vadd.xlane.f32.xlu0 %v397
        %v448 = vpop.xlane.xlu0 %447
        %449 = vadd.xlane.f32.xlu0 %v398
        %v450 = vpop.xlane.xlu0 %449
        %451 = vadd.xlane.f32.xlu0 %v399
        %v452 = vpop.xlane.xlu0 %451
        %453 = vadd.xlane.f32.xlu0 %v400
        %v454 = vpop.xlane.xlu0 %453
        %455 = vadd.xlane.f32.xlu0 %v401
        %v456 = vpop.xlane.xlu0 %455
        %457 = vadd.xlane.f32.xlu0 %v402
        %v458 = vpop.xlane.xlu0 %457
        %459 = vadd.xlane.f32.xlu0 %v403
        %v460 = vpop.xlane.xlu0 %459
        %461 = vadd.xlane.f32.xlu0 %v404
        %v462 = vpop.xlane.xlu0 %461
        %463 = vadd.xlane.f32.xlu0 %v405
        %v464 = vpop.xlane.xlu0 %463
        %465 = vadd.xlane.f32.xlu0 %v406
        %v466 = vpop.xlane.xlu0 %465
        %467 = vadd.xlane.f32.xlu0 %v407
        %v468 = vpop.xlane.xlu0 %467
        %469 = vadd.xlane.f32.xlu0 %v408
        %v470 = vpop.xlane.xlu0 %469
        %471 = vadd.xlane.f32.xlu0 %v409
        %v472 = vpop.xlane.xlu0 %471
        %473 = vadd.xlane.f32.xlu0 %v410
        %v474 = vpop.xlane.xlu0 %473
        %v475 = vmul.f32 %v412, 0.0078125
        %v476 = vmul.f32 %v414, 0.0078125
        %v477 = vmul.f32 %v416, 0.0078125
        %v478 = vmul.f32 %v418, 0.0078125
        %v479 = vmul.f32 %v420, 0.0078125
        %v480 = vmul.f32 %v422, 0.0078125
        %v481 = vmul.f32 %v424, 0.0078125
        %v482 = vmul.f32 %v426, 0.0078125
        %v483 = vmul.f32 %v428, 0.0078125
        %v484 = vmul.f32 %v430, 0.0078125
        %v485 = vmul.f32 %v432, 0.0078125
        %v486 = vmul.f32 %v434, 0.0078125
        %v487 = vmul.f32 %v436, 0.0078125
        %v488 = vmul.f32 %v438, 0.0078125
        %v489 = vmul.f32 %v440, 0.0078125
        %v490 = vmul.f32 %v442, 0.0078125
        %v491 = vmul.f32 %v444, 0.0078125
        %v492 = vmul.f32 %v446, 0.0078125
        %v493 = vmul.f32 %v448, 0.0078125
        %v494 = vmul.f32 %v450, 0.0078125
        %v495 = vmul.f32 %v452, 0.0078125
        %v496 = vmul.f32 %v454, 0.0078125
        %v497 = vmul.f32 %v456, 0.0078125
        %v498 = vmul.f32 %v458, 0.0078125
        %v499 = vmul.f32 %v460, 0.0078125
        %v500 = vmul.f32 %v462, 0.0078125
        %v501 = vmul.f32 %v464, 0.0078125
        %v502 = vmul.f32 %v466, 0.0078125
        %v503 = vmul.f32 %v468, 0.0078125
        %v504 = vmul.f32 %v470, 0.0078125
        %v505 = vmul.f32 %v472, 0.0078125
        %v506 = vmul.f32 %v474, 0.0078125
        %v507 = vadd.f32 %v475, 1e-05
        %v508 = vadd.f32 %v476, 1e-05
        %v509 = vadd.f32 %v477, 1e-05
        %v510 = vadd.f32 %v478, 1e-05
        %v511 = vadd.f32 %v479, 1e-05
        %v512 = vadd.f32 %v480, 1e-05
        %v513 = vadd.f32 %v481, 1e-05
        %v514 = vadd.f32 %v482, 1e-05
        %v515 = vadd.f32 %v483, 1e-05
        %v516 = vadd.f32 %v484, 1e-05
        %v517 = vadd.f32 %v485, 1e-05
        %v518 = vadd.f32 %v486, 1e-05
        %v519 = vadd.f32 %v487, 1e-05
        %v520 = vadd.f32 %v488, 1e-05
        %v521 = vadd.f32 %v489, 1e-05
        %v522 = vadd.f32 %v490, 1e-05
        %v523 = vadd.f32 %v491, 1e-05
        %v524 = vadd.f32 %v492, 1e-05
        %v525 = vadd.f32 %v493, 1e-05
        %v526 = vadd.f32 %v494, 1e-05
        %v527 = vadd.f32 %v495, 1e-05
        %v528 = vadd.f32 %v496, 1e-05
        %v529 = vadd.f32 %v497, 1e-05
        %v530 = vadd.f32 %v498, 1e-05
        %v531 = vadd.f32 %v499, 1e-05
        %v532 = vadd.f32 %v500, 1e-05
        %v533 = vadd.f32 %v501, 1e-05
        %v534 = vadd.f32 %v502, 1e-05
        %v535 = vadd.f32 %v503, 1e-05
        %v536 = vadd.f32 %v504, 1e-05
        %v537 = vadd.f32 %v505, 1e-05
        %v538 = vadd.f32 %v506, 1e-05
        %v539 = vrsqrt.pop %v507
        %v540 = vrsqrt.pop %v508
        %v541 = vrsqrt.pop %v509
        %v542 = vrsqrt.pop %v510
        %v543 = vrsqrt.pop %v511
        %v544 = vrsqrt.pop %v512
        %v545 = vrsqrt.pop %v513
        %v546 = vrsqrt.pop %v514
        %v547 = vrsqrt.pop %v515
        %v548 = vrsqrt.pop %v516
        %v549 = vrsqrt.pop %v517
        %v550 = vrsqrt.pop %v518
        %v551 = vrsqrt.pop %v519
        %v552 = vrsqrt.pop %v520
        %v553 = vrsqrt.pop %v521
        %v554 = vrsqrt.pop %v522
        %v555 = vrsqrt.pop %v523
        %v556 = vrsqrt.pop %v524
        %v557 = vrsqrt.pop %v525
        %v558 = vrsqrt.pop %v526
        %v559 = vrsqrt.pop %v527
        %v560 = vrsqrt.pop %v528
        %v561 = vrsqrt.pop %v529
        %v562 = vrsqrt.pop %v530
        %v563 = vrsqrt.pop %v531
        %v564 = vrsqrt.pop %v532
        %v565 = vrsqrt.pop %v533
        %v566 = vrsqrt.pop %v534
        %v567 = vrsqrt.pop %v535
        %v568 = vrsqrt.pop %v536
        %v569 = vrsqrt.pop %v537
        %v570 = vrsqrt.pop %v538
        %v571 = vmul.f32 %v347, %v539
        %v572 = vmul.f32 %v348, %v540
        %v573 = vmul.f32 %v349, %v541
        %v574 = vmul.f32 %v350, %v542
        %v575 = vmul.f32 %v351, %v543
        %v576 = vmul.f32 %v352, %v544
        %v577 = vmul.f32 %v353, %v545
        %v578 = vmul.f32 %v354, %v546
        %v579 = vmul.f32 %v355, %v547
        %v580 = vmul.f32 %v356, %v548
        %v581 = vmul.f32 %v357, %v549
        %v582 = vmul.f32 %v358, %v550
        %v583 = vmul.f32 %v359, %v551
        %v584 = vmul.f32 %v360, %v552
        %v585 = vmul.f32 %v361, %v553
        %v586 = vmul.f32 %v362, %v554
        %v587 = vmul.f32 %v363, %v555
        %v588 = vmul.f32 %v364, %v556
        %v589 = vmul.f32 %v365, %v557
        %v590 = vmul.f32 %v366, %v558
        %v591 = vmul.f32 %v367, %v559
        %v592 = vmul.f32 %v368, %v560
        %v593 = vmul.f32 %v369, %v561
        %v594 = vmul.f32 %v370, %v562
        %v595 = vmul.f32 %v371, %v563
        %v596 = vmul.f32 %v372, %v564
        %v597 = vmul.f32 %v373, %v565
        %v598 = vmul.f32 %v374, %v566
        %v599 = vmul.f32 %v375, %v567
        %v600 = vmul.f32 %v376, %v568
        %v601 = vmul.f32 %v377, %v569
        %v602 = vmul.f32 %v378, %v570
        %v603 = vld [vmem:[%s191] sm:$0x1]
        %v604 = vld [vmem:[%s191 + $0x1] sm:$0x1]
        %v605 = vlaneseq
        %v606 = vshrl.u32 %v605, 7
        %v607 = vsub.s32 0, %v606
        %v608 = vrot.slane %v603, %v607
        %v609 = vmul.f32 %v571, %v608
        %v610 = vmul.f32 %v572, %v608
        %v611 = vmul.f32 %v573, %v608
        %v612 = vmul.f32 %v574, %v608
        %v613 = vmul.f32 %v575, %v608
        %v614 = vmul.f32 %v576, %v608
        %v615 = vmul.f32 %v577, %v608
        %v616 = vmul.f32 %v578, %v608
        %v617 = vmul.f32 %v579, %v608
        %v618 = vmul.f32 %v580, %v608
        %v619 = vmul.f32 %v581, %v608
        %v620 = vmul.f32 %v582, %v608
        %v621 = vmul.f32 %v583, %v608
        %v622 = vmul.f32 %v584, %v608
        %v623 = vmul.f32 %v585, %v608
        %v624 = vmul.f32 %v586, %v608
        %v625 = vmul.f32 %v587, %v608
        %v626 = vmul.f32 %v588, %v608
        %v627 = vmul.f32 %v589, %v608
        %v628 = vmul.f32 %v590, %v608
        %v629 = vmul.f32 %v591, %v608
        %v630 = vmul.f32 %v592, %v608
        %v631 = vmul.f32 %v593, %v608
        %v632 = vmul.f32 %v594, %v608
        %v633 = vmul.f32 %v595, %v608
        %v634 = vmul.f32 %v596, %v608
        %v635 = vmul.f32 %v597, %v608
        %v636 = vmul.f32 %v598, %v608
        %v637 = vmul.f32 %v599, %v608
        %v638 = vmul.f32 %v600, %v608
        %v639 = vmul.f32 %v601, %v608
        %v640 = vmul.f32 %v602, %v608
        %v641 = vlaneseq
        %v642 = vshrl.u32 %v641, 7
        %v643 = vsub.s32 0, %v642
        %v644 = vrot.slane %v604, %v643
        %v645 = vadd.f32 %v609, %v644
        %v646 = vadd.f32 %v610, %v644
        %v647 = vadd.f32 %v611, %v644
        %v648 = vadd.f32 %v612, %v644
        %v649 = vadd.f32 %v613, %v644
        %v650 = vadd.f32 %v614, %v644
        %v651 = vadd.f32 %v615, %v644
        %v652 = vadd.f32 %v616, %v644
        %v653 = vadd.f32 %v617, %v644
        %v654 = vadd.f32 %v618, %v644
        %v655 = vadd.f32 %v619, %v644
        %v656 = vadd.f32 %v620, %v644
        %v657 = vadd.f32 %v621, %v644
        %v658 = vadd.f32 %v622, %v644
        %v659 = vadd.f32 %v623, %v644
        %v660 = vadd.f32 %v624, %v644
        %v661 = vadd.f32 %v625, %v644
        %v662 = vadd.f32 %v626, %v644
        %v663 = vadd.f32 %v627, %v644
        %v664 = vadd.f32 %v628, %v644
        %v665 = vadd.f32 %v629, %v644
        %v666 = vadd.f32 %v630, %v644
        %v667 = vadd.f32 %v631, %v644
        %v668 = vadd.f32 %v632, %v644
        %v669 = vadd.f32 %v633, %v644
        %v670 = vadd.f32 %v634, %v644
        %v671 = vadd.f32 %v635, %v644
        %v672 = vadd.f32 %v636, %v644
        %v673 = vadd.f32 %v637, %v644
        %v674 = vadd.f32 %v638, %v644
        %v675 = vadd.f32 %v639, %v644
        %v676 = vadd.f32 %v640, %v644
        %677 = vst [vmem:[%s216] sm:$0xff] %v645
        %678 = vst [vmem:[%s216 + $0x8] sm:$0xff] %v646
        %679 = vst [vmem:[%s216 + $0x10] sm:$0xff] %v647
        %680 = vst [vmem:[%s216 + $0x18] sm:$0xff] %v648
        %681 = vst [vmem:[%s216 + $0x20] sm:$0xff] %v649
        %682 = vst [vmem:[%s216 + $0x28] sm:$0xff] %v650
        %683 = vst [vmem:[%s216 + $0x30] sm:$0xff] %v651
        %684 = vst [vmem:[%s216 + $0x38] sm:$0xff] %v652
        %685 = vst [vmem:[%s216 + $0x40] sm:$0xff] %v653
        %686 = vst [vmem:[%s216 + $0x48] sm:$0xff] %v654
        %687 = vst [vmem:[%s216 + $0x50] sm:$0xff] %v655
        %688 = vst [vmem:[%s216 + $0x58] sm:$0xff] %v656
        %689 = vst [vmem:[%s216 + $0x60] sm:$0xff] %v657
        %690 = vst [vmem:[%s216 + $0x68] sm:$0xff] %v658
        %691 = vst [vmem:[%s216 + $0x70] sm:$0xff] %v659
        %692 = vst [vmem:[%s216 + $0x78] sm:$0xff] %v660
        %693 = vst [vmem:[%s216 + $0x80] sm:$0xff] %v661
        %694 = vst [vmem:[%s216 + $0x88] sm:$0xff] %v662
        %695 = vst [vmem:[%s216 + $0x90] sm:$0xff] %v663
        %696 = vst [vmem:[%s216 + $0x98] sm:$0xff] %v664
        %697 = vst [vmem:[%s216 + $0xa0] sm:$0xff] %v665
        %698 = vst [vmem:[%s216 + $0xa8] sm:$0xff] %v666
        %699 = vst [vmem:[%s216 + $0xb0] sm:$0xff] %v667
        %700 = vst [vmem:[%s216 + $0xb8] sm:$0xff] %v668
        %701 = vst [vmem:[%s216 + $0xc0] sm:$0xff] %v669
        %702 = vst [vmem:[%s216 + $0xc8] sm:$0xff] %v670
        %703 = vst [vmem:[%s216 + $0xd0] sm:$0xff] %v671
        %704 = vst [vmem:[%s216 + $0xd8] sm:$0xff] %v672
        %705 = vst [vmem:[%s216 + $0xe0] sm:$0xff] %v673
        %706 = vst [vmem:[%s216 + $0xe8] sm:$0xff] %v674
        %707 = vst [vmem:[%s216 + $0xf0] sm:$0xff] %v675
        %708 = vst [vmem:[%s216 + $0xf8] sm:$0xff] %v676
        %s709 = sand.u32 %s98, 1
        %s710 = scalar_lea.sflag [#allocation4], %s709
        %s711 = sand.u32 %s98, 1
        %s712 = smul.addr %s711, 256
        %s713 = scalar_lea.vmem [#allocation7], %s712
        // Predicated region
        $region37: #{tpu_custom_call.1} parent=27 // pred_check
          %p714 = pneg %p108
        $region38: #{tpu_custom_call.1} parent=27 // pred_check_branch
          %716 = sbr.rel (%p714) target = $region40
        $region39: #{tpu_custom_call.1} parent=27 // pred_region
          %s717 = smul.u32 32, %s27
          %s719 = ssub.s32 4096, 4096
          %720 = vsyncadd %s710, %s719
          %s721 = smul.addr %s26, 32
          %s722 = sadd.s32 %s717, %s721
          %s723 = smul.addr %s722, 128
          %s724 = scalar_lea.hbm %s2, %s723
          %s725 = sshll.u32 %s713, 4
          %s726 = int_to_ptr.vmem [resolvable:$true] %s725
          %731 = dma.vmem_to_hbm [thread:$0]  %s726, 4096, %s724, %s710, 128, 128, 8
        $region40: #{tpu_custom_call.1} parent=27 // pred_fallthru
          _
      $region28: #{tpu_custom_call.1} parent=5 // pred_fallthru
        _
      %p732 = scmp.le.s32.totalorder 2, %s17
      // Predicated region
      $region41: #{tpu_custom_call.1} parent=5 // pred_check
        %p733 = pneg %p732
      $region42: #{tpu_custom_call.1} parent=5 // pred_check_branch
        %735 = sbr.rel (%p733) target = $region44
      $region43: #{tpu_custom_call.1} parent=5 // pred_region
        %s736 = ssub.s32 %s17, 2
        // Predicated region
        $region45: #{tpu_custom_call.1} parent=43 // pred_check
          %p737 = pneg %p114
        $region46: #{tpu_custom_call.1} parent=43 // pred_check_branch
          %739 = sbr.rel (%p737) target = $region48
        $region47: #{tpu_custom_call.1} parent=43 // pred_region
          %s740 = sand.u32 %s99, 1
          %s741 = scalar_lea.sflag [#allocation4], %s740
          %s742 = sand.u32 %s99, 1
          %s743 = smul.addr %s742, 256
          %s744 = scalar_lea.vmem [#allocation7], %s743
          %745 = dma.done %s741, 4096
        $region48: #{tpu_custom_call.1} parent=43 // pred_fallthru
          _
      $region44: #{tpu_custom_call.1} parent=5 // pred_fallthru
        _
    $region6: #{tpu_custom_call.1} parent=1 // loop_footer
      %s21 = sadd.s32 1, %s17
    $region7: #{tpu_custom_call.1} parent=1 // loop_footer_branch
      %16 = sbr.rel target = $region3
    $region8: #{tpu_custom_call.1} parent=1 // loop_exit
      _
    %746 = vsyncpa [#allocation3], 1
    %s747 = scalar_lea.sflag [#allocation3], 1
    %748 = vsyncpa %s747, 1
    %749 = vsyncpa [#allocation6], 1
    %s750 = scalar_lea.sflag [#allocation6], 1
    %751 = vsyncpa %s750, 1
    %752 = vsyncpa [#allocation4], 1
    %s753 = scalar_lea.sflag [#allocation4], 1
    %754 = vsyncpa %s753, 1

</llo_original>
